<compile_context>
chip_gen: v6e
topology: v6e:2x2x1
jax: 0.10.0
libtpu: 0.0.40
codegen_flags: <defaults>
</compile_context>

<pallas_src>
import jax
import jax.numpy as jnp
from jax.experimental import pallas as pl
from jax.experimental.pallas import tpu as pltpu

_LANES = 128


def _round_up(x, m):
    return (x + m - 1) // m * m


def actor_kernel(x_ref, w1_ref, b1_ref, w2_ref, b2_ref, w3_ref, b3_ref, o_ref):
    """One batch tile: 3 matmuls (f32 accumulation) + 2 ReLU + sigmoid(3 ch)."""
    mm_dtype = w1_ref.dtype  # bf16 (MXU-native) or f32

    # In-kernel cast of the streamed f32 tile (hides under the DMA).
    x = x_ref[...].astype(mm_dtype)  # (TB, num_inputs)

    # linear1 + relu  (bias add / relu in f32)
    h1 = jnp.dot(x, w1_ref[...], preferred_element_type=jnp.float32) + b1_ref[...]
    h1 = jnp.maximum(h1, 0.0).astype(mm_dtype)

    # linear2 + relu
    h2 = jnp.dot(h1, w2_ref[...], preferred_element_type=jnp.float32) + b2_ref[...]
    h2 = jnp.maximum(h2, 0.0).astype(mm_dtype)

    # mu head: lane-dense 128-wide matmul, but only the 3 channels the
    # PyTorch forward uses are sigmoided and stored (narrow (TB, 3) output).
    mu = jnp.dot(h2, w3_ref[...], preferred_element_type=jnp.float32) + b3_ref[...]
    n_out = o_ref.shape[-1]
    o_ref[...] = jax.nn.sigmoid(mu[:, :n_out]).astype(o_ref.dtype)


def prepare_actor_params(params, compute_dtype=jnp.bfloat16):
    """One-time weight preparation (hoisted out of the per-call forward).

    - casts matmul weights to the MXU compute dtype (bf16 by default),
    - keeps biases in f32,
    - keeps only the 3 mu channels forward() actually reads and zero-pads
      them to a lane-dense 128-wide tile for the final matmul.
    Weights are laid out (in_features, out_features): the kernel does x@W+b.
    """
    w1, b1, w2, b2, w3, b3 = params
    n_used = 3  # forward() returns sigmoid of mu channels 0, 1, 2
    assert w3.shape[1] >= n_used, "mu head must have at least 3 outputs"
    h2_dim = w2.shape[1]
    out_w = _round_up(n_used, _LANES)

    w3p = jnp.zeros((h2_dim, out_w), compute_dtype).at[:, :n_used].set(
        w3[:, :n_used].astype(compute_dtype))
    b3p = jnp.zeros((1, out_w), jnp.float32).at[:, :n_used].set(
        b3.reshape(1, -1)[:, :n_used].astype(jnp.float32))

    return (w1.astype(compute_dtype),
            b1.reshape(1, -1).astype(jnp.float32),
            w2.astype(compute_dtype),
            b2.reshape(1, -1).astype(jnp.float32),
            w3p, b3p)


def _choose_batch_tile(B, tile_b, row_align):
    # Prefer >= 2 tiles whenever B allows (v7x: 2 TensorCores share the grid),
    # rows aligned to the bf16 sublane-packing granularity (16).
    tb = max(row_align, min(tile_b, _round_up(max(B // 2, 1), row_align)))
    return tb, _round_up(B, tb)


def actor_forward(x, prepared_params, *, tile_b=2048, num_out=3):
    """Fused Actor forward. Returns (B, 3) = sigmoid(mu[:, 0:3])."""
    w1, b1, w2, b2, w3p, b3p = prepared_params
    B, num_inputs = x.shape
    h1_dim = w1.shape[1]
    h2_dim = w2.shape[1]
    out_w = w3p.shape[1]  # padded mu-head width (128)

    row_align = 16 if w1.dtype == jnp.bfloat16 else 8
    tb, Bp = _choose_batch_tile(B, tile_b, row_align)
    xp = x if Bp == B else jnp.pad(x, ((0, Bp - B), (0, 0)))

    grid = (Bp // tb,)
    const = lambda i: (0, 0)  # weights/biases: single block, resident in VMEM

    wsize = jnp.dtype(w1.dtype).itemsize
    xsize = jnp.dtype(x.dtype).itemsize
    weight_elems = num_inputs * h1_dim + h1_dim * h2_dim + h2_dim * out_w
    cost = pl.CostEstimate(
        flops=2 * Bp * weight_elems,
        transcendentals=Bp * num_out,
        bytes_accessed=(Bp * num_inputs * xsize        # streamed f32 x tiles
                        + Bp * num_out * 4             # narrow f32 output
                        + weight_elems * wsize         # resident weights
                        + (h1_dim + h2_dim + out_w) * 4),  # biases
    )

    out = pl.pallas_call(
        actor_kernel,
        out_shape=jax.ShapeDtypeStruct((Bp, num_out), jnp.float32),
        grid=grid,
        in_specs=[
            pl.BlockSpec((tb, num_inputs), lambda i: (i, 0)),  # x  (streamed)
            pl.BlockSpec((num_inputs, h1_dim), const),         # w1 (resident)
            pl.BlockSpec((1, h1_dim), const),                  # b1
            pl.BlockSpec((h1_dim, h2_dim), const),             # w2
            pl.BlockSpec((1, h2_dim), const),                  # b2
            pl.BlockSpec((h2_dim, out_w), const),              # w3 (padded)
            pl.BlockSpec((1, out_w), const),                   # b3 (padded)
        ],
        out_specs=pl.BlockSpec((tb, num_out), lambda i: (i, 0)),
        compiler_params=pltpu.CompilerParams(
            dimension_semantics=("parallel",)),  # shard tiles across v7x TCs
        cost_estimate=cost,
    )(xp, w1, b1, w2, b2, w3p, b3p)

    return out if Bp == B else out[:B]


def init_linear(key, fan_in, fan_out):
    # Mimic PyTorch nn.Linear default init: U(-1/sqrt(fan_in), 1/sqrt(fan_in)).
    kw, kb = jax.random.split(key)
    bound = 1.0 / jnp.sqrt(jnp.float32(fan_in))
    w = jax.random.uniform(kw, (fan_in, fan_out), jnp.float32, -bound, bound)
    b = jax.random.uniform(kb, (1, fan_out), jnp.float32, -bound, bound)
    return w, b


if __name__ == "__main__":
    # Shapes implied by the module: num_inputs features, two hidden layers,
    # 3 action channels (h, s, v). Batch chosen so the grid has 2 tiles and
    # row padding is exercised.
    batch = 200
    num_inputs = 16
    hidden = (32, 32)
    num_outputs = 3  # action_space.shape[0]; forward uses channels 0..2

    key = jax.random.PRNGKey(0)
    k_x, k1, k2, k3 = jax.random.split(key, 4)

    x = jax.random.normal(k_x, (batch, num_inputs), jnp.float32)
    w1, b1 = init_linear(k1, num_inputs, hidden[0])
    w2, b2 = init_linear(k2, hidden[0], hidden[1])
    w3, b3 = init_linear(k3, hidden[1], num_outputs)

    # One-time parameter prep (outside the per-step forward).
    prepared = prepare_actor_params((w1, b1, w2, b2, w3, b3))

    out = actor_forward(x, prepared)  # 2 batch tiles of 112 rows
    out = jax.block_until_ready(out)
    assert out.shape == (batch, 3)

    # Reference 1: same bf16 matmul inputs / f32 accumulation as the kernel.
    bf = jnp.bfloat16
    r1 = jnp.maximum(jnp.dot(x.astype(bf), w1.astype(bf),
                             preferred_element_type=jnp.float32) + b1, 0.0)
    r2 = jnp.maximum(jnp.dot(r1.astype(bf), w2.astype(bf),
                             preferred_element_type=jnp.float32) + b2, 0.0)
    mu_ref = jnp.dot(r2.astype(bf), w3.astype(bf),
                     preferred_element_type=jnp.float32) + b3
    ref_bf16 = jax.nn.sigmoid(mu_ref)[:, :3]
    assert jnp.allclose(out, ref_bf16, atol=1e-4, rtol=1e-4), (
        float(jnp.max(jnp.abs(out - ref_bf16))))

    # Reference 2: pure-f32 forward of the original PyTorch module.
    f1 = jnp.maximum(x @ w1 + b1, 0.0)
    f2 = jnp.maximum(f1 @ w2 + b2, 0.0)
    ref_f32 = jax.nn.sigmoid(f2 @ w3 + b3)[:, :3]
    assert jnp.allclose(out, ref_f32, atol=3e-2), (
        float(jnp.max(jnp.abs(out - ref_f32))))

    print("KERNEL_OK")
</pallas_src>

<mosaic_0001>
module attributes {stable_mosaic.version = 11 : i64} {
  func.func @actor_kernel(%arg0: i32, %arg1: memref<112x16xf32, #tpu.memory_space<vmem>>, %arg2: memref<16x32xbf16, #tpu.memory_space<vmem>>, %arg3: memref<1x32xf32, #tpu.memory_space<vmem>>, %arg4: memref<32x32xbf16, #tpu.memory_space<vmem>>, %arg5: memref<1x32xf32, #tpu.memory_space<vmem>>, %arg6: memref<32x128xbf16, #tpu.memory_space<vmem>>, %arg7: memref<1x128xf32, #tpu.memory_space<vmem>>, %arg8: memref<112x3xf32, #tpu.memory_space<vmem>>) attributes {dimension_semantics = [#tpu.dimension_semantics<parallel>], iteration_bounds = array<i64: 2>, scalar_prefetch = 0 : i64, scratch_operands = 0 : i64, tpu.core_type = #tpu.core_type<tc>, window_params = [{transform_indices = @transform_0, window_bounds = array<i64: 112, 16>}, {pipeline_mode = #tpu.pipeline_mode<synchronous>, transform_indices = @transform_1, window_bounds = array<i64: 16, 32>}, {pipeline_mode = #tpu.pipeline_mode<synchronous>, transform_indices = @transform_2, window_bounds = array<i64: 1, 32>}, {pipeline_mode = #tpu.pipeline_mode<synchronous>, transform_indices = @transform_3, window_bounds = array<i64: 32, 32>}, {pipeline_mode = #tpu.pipeline_mode<synchronous>, transform_indices = @transform_4, window_bounds = array<i64: 1, 32>}, {pipeline_mode = #tpu.pipeline_mode<synchronous>, transform_indices = @transform_5, window_bounds = array<i64: 32, 128>}, {pipeline_mode = #tpu.pipeline_mode<synchronous>, transform_indices = @transform_6, window_bounds = array<i64: 1, 128>}, {transform_indices = @transform_7, window_bounds = array<i64: 112, 3>}]} {
    %c0 = arith.constant 0 : index
    %c0_0 = arith.constant 0 : index
    %0 = vector.load %arg1[%c0, %c0_0] : memref<112x16xf32, #tpu.memory_space<vmem>>, vector<112x16xf32>
    %1 = arith.truncf %0 : vector<112x16xf32> to vector<112x16xbf16>
    %c0_1 = arith.constant 0 : index
    %c0_2 = arith.constant 0 : index
    %2 = vector.load %arg2[%c0_1, %c0_2] : memref<16x32xbf16, #tpu.memory_space<vmem>>, vector<16x32xbf16>
    %cst = arith.constant dense<0.000000e+00> : vector<112x32xf32>
    %3 = tpu.matmul %1, %2, %cst {dimension_numbers = #tpu.dot_dimension_numbers<[1], [0], [0], [1], [0, 0, 1, 1], [], []>} : vector<112x16xbf16>, vector<16x32xbf16>, vector<112x32xf32> -> vector<112x32xf32>
    %c0_3 = arith.constant 0 : index
    %c0_4 = arith.constant 0 : index
    %4 = vector.load %arg3[%c0_3, %c0_4] : memref<1x32xf32, #tpu.memory_space<vmem>>, vector<1x32xf32>
    %5 = vector.broadcast %4 : vector<1x32xf32> to vector<112x32xf32>
    %6 = arith.addf %3, %5 : vector<112x32xf32>
    %cst_5 = arith.constant 0.000000e+00 : f32
    %7 = vector.broadcast %cst_5 : f32 to vector<112x32xf32>
    %8 = arith.maximumf %6, %7 : vector<112x32xf32>
    %9 = arith.truncf %8 : vector<112x32xf32> to vector<112x32xbf16>
    %c0_6 = arith.constant 0 : index
    %c0_7 = arith.constant 0 : index
    %10 = vector.load %arg4[%c0_6, %c0_7] : memref<32x32xbf16, #tpu.memory_space<vmem>>, vector<32x32xbf16>
    %cst_8 = arith.constant dense<0.000000e+00> : vector<112x32xf32>
    %11 = tpu.matmul %9, %10, %cst_8 {dimension_numbers = #tpu.dot_dimension_numbers<[1], [0], [0], [1], [0, 0, 1, 1], [], []>} : vector<112x32xbf16>, vector<32x32xbf16>, vector<112x32xf32> -> vector<112x32xf32>
    %c0_9 = arith.constant 0 : index
    %c0_10 = arith.constant 0 : index
    %12 = vector.load %arg5[%c0_9, %c0_10] : memref<1x32xf32, #tpu.memory_space<vmem>>, vector<1x32xf32>
    %13 = vector.broadcast %12 : vector<1x32xf32> to vector<112x32xf32>
    %14 = arith.addf %11, %13 : vector<112x32xf32>
    %cst_11 = arith.constant 0.000000e+00 : f32
    %15 = vector.broadcast %cst_11 : f32 to vector<112x32xf32>
    %16 = arith.maximumf %14, %15 : vector<112x32xf32>
    %17 = arith.truncf %16 : vector<112x32xf32> to vector<112x32xbf16>
    %c0_12 = arith.constant 0 : index
    %c0_13 = arith.constant 0 : index
    %18 = vector.load %arg6[%c0_12, %c0_13] : memref<32x128xbf16, #tpu.memory_space<vmem>>, vector<32x128xbf16>
    %cst_14 = arith.constant dense<0.000000e+00> : vector<112x128xf32>
    %19 = tpu.matmul %17, %18, %cst_14 {dimension_numbers = #tpu.dot_dimension_numbers<[1], [0], [0], [1], [0, 0, 1, 1], [], []>} : vector<112x32xbf16>, vector<32x128xbf16>, vector<112x128xf32> -> vector<112x128xf32>
    %c0_15 = arith.constant 0 : index
    %c0_16 = arith.constant 0 : index
    %20 = vector.load %arg7[%c0_15, %c0_16] : memref<1x128xf32, #tpu.memory_space<vmem>>, vector<1x128xf32>
    %21 = vector.broadcast %20 : vector<1x128xf32> to vector<112x128xf32>
    %22 = arith.addf %19, %21 : vector<112x128xf32>
    %23 = vector.extract_strided_slice %22 {offsets = [0, 0], sizes = [112, 3], strides = [1, 1]} : vector<112x128xf32> to vector<112x3xf32>
    %24 = arith.negf %23 : vector<112x3xf32>
    %25 = math.exp %24 : vector<112x3xf32>
    %cst_17 = arith.constant 1.000000e+00 : f32
    %26 = vector.broadcast %cst_17 : f32 to vector<112x3xf32>
    %27 = arith.addf %26, %25 : vector<112x3xf32>
    %28 = arith.divf %26, %27 : vector<112x3xf32>
    %c0_18 = arith.constant 0 : index
    %c0_19 = arith.constant 0 : index
    %29 = vector.load %arg8[%c0_18, %c0_19] : memref<112x3xf32, #tpu.memory_space<vmem>>, vector<112x3xf32>
    tpu.vector_store %arg8[%c0_18, %c0_19], %28 {strides = array<i32>} : memref<112x3xf32, #tpu.memory_space<vmem>>, vector<112x3xf32>,
    return
  }
  func.func @transform_0(%arg0: i32) -> (i32, i32) {
    %c0_i32 = arith.constant 0 : i32
    %c0_i32_0 = arith.constant 0 : i32
    return %arg0, %c0_i32 : i32, i32
  }
  func.func @transform_1(%arg0: i32) -> (i32, i32) {
    %c0_i32 = arith.constant 0 : i32
    %c0_i32_0 = arith.constant 0 : i32
    %c0_i32_1 = arith.constant 0 : i32
    return %c0_i32, %c0_i32_0 : i32, i32
  }
  func.func @transform_2(%arg0: i32) -> (i32, i32) {
    %c0_i32 = arith.constant 0 : i32
    %c0_i32_0 = arith.constant 0 : i32
    %c0_i32_1 = arith.constant 0 : i32
    return %c0_i32, %c0_i32_0 : i32, i32
  }
  func.func @transform_3(%arg0: i32) -> (i32, i32) {
    %c0_i32 = arith.constant 0 : i32
    %c0_i32_0 = arith.constant 0 : i32
    %c0_i32_1 = arith.constant 0 : i32
    return %c0_i32, %c0_i32_0 : i32, i32
  }
  func.func @transform_4(%arg0: i32) -> (i32, i32) {
    %c0_i32 = arith.constant 0 : i32
    %c0_i32_0 = arith.constant 0 : i32
    %c0_i32_1 = arith.constant 0 : i32
    return %c0_i32, %c0_i32_0 : i32, i32
  }
  func.func @transform_5(%arg0: i32) -> (i32, i32) {
    %c0_i32 = arith.constant 0 : i32
    %c0_i32_0 = arith.constant 0 : i32
    %c0_i32_1 = arith.constant 0 : i32
    return %c0_i32, %c0_i32_0 : i32, i32
  }
  func.func @transform_6(%arg0: i32) -> (i32, i32) {
    %c0_i32 = arith.constant 0 : i32
    %c0_i32_0 = arith.constant 0 : i32
    %c0_i32_1 = arith.constant 0 : i32
    return %c0_i32, %c0_i32_0 : i32, i32
  }
  func.func @transform_7(%arg0: i32) -> (i32, i32) {
    %c0_i32 = arith.constant 0 : i32
    %c0_i32_0 = arith.constant 0 : i32
    return %arg0, %c0_i32 : i32, i32
  }
}

</mosaic_0001>

<llo_original>
// kernel: tpu_custom_call.1
$region0: #{tpu_custom_call.1}
  #allocation0 [shape = 'u32[]', space=smem, size = 0x4, offset = 0x4, fixed_abs, tag = 'smem constant byte address 0x4 - core index']
  #allocation1 [shape = 'u32[144,128]{1,0:T(1,128)}', space=vmem, size = 0x12000, scoped, tag = 'internal scratch']
  %s0 = inlined_call_operand.vmem [shape: f32[224,16], index: 0, kind: input, shape index: {}]
  %s1 = inlined_call_operand.vmem [shape: bf16[16,32], index: 1, kind: input, shape index: {}]
  %s2 = inlined_call_operand.vmem [shape: f32[1,32], index: 2, kind: input, shape index: {}]
  %s3 = inlined_call_operand.vmem [shape: bf16[32,32], index: 3, kind: input, shape index: {}]
  %s4 = inlined_call_operand.vmem [shape: f32[1,32], index: 4, kind: input, shape index: {}]
  %s5 = inlined_call_operand.vmem [shape: bf16[32,128], index: 5, kind: input, shape index: {}]
  %s6 = inlined_call_operand.vmem [shape: f32[1,128], index: 6, kind: input, shape index: {}]
  %s7 = inlined_call_operand.vmem [shape: f32[224,3], index: 7, kind: output, shape index: {}]
  %s8 = sld [smem:[#allocation0]]
  $region61: #{tpu_custom_call.1} parent=0
    _
  %s10 = ssub.s32 1, %s8
  %s11 = scalar_select 0, %s10, %s8
  loop: start=0, step=1, limit=4
  $region2: #{tpu_custom_call.1} parent=0 // loop_pre_header
    _
  $region3: #{tpu_custom_call.1} parent=0 // loop_header
    %s13 = sphi 0, %s17
    %p14 = scmp.ge.s32.totalorder %s13, 4
    %s23 = sphi 0, %s25
    %s26 = sphi 0, %s23
    %s27 = sphi 0, %s26
    %s43 = sphi 0, %s27
    %s47 = sphi 0, %s47
    %s49 = sphi 0, %s47
    %s50 = sphi 0, %s49
    %s64 = sphi 0, %s50
    %s68 = sphi 0, %s68
    %s70 = sphi 0, %s68
    %s71 = sphi 0, %s70
    %s85 = sphi 0, %s71
    %s89 = sphi 0, %s89
    %s91 = sphi 0, %s89
    %s92 = sphi 0, %s91
    %s106 = sphi 0, %s92
    %s110 = sphi 0, %s110
    %s112 = sphi 0, %s110
    %s113 = sphi 0, %s112
    %s127 = sphi 0, %s113
    %s131 = sphi 0, %s131
    %s133 = sphi 0, %s131
    %s134 = sphi 0, %s133
    %s148 = sphi 0, %s134
    %s152 = sphi 0, %s152
    %s154 = sphi 0, %s152
    %s155 = sphi 0, %s154
    %s169 = sphi 0, %s155
    %s175 = sphi 0, %s177
    %s178 = sphi 0, %s175
    %s179 = sphi 0, %s178
    %s195 = sphi 0, %s179
  $region4: #{tpu_custom_call.1} parent=0 // loop_header_branch
    %16 = sbr.rel (%p14) target = $region8
  $region5: #{tpu_custom_call.1} parent=0 // loop_body
    %s18 = ssub.s32 %s13, 1
    %s19 = ssub.s32 %s13, 2
    %s20 = sadd.s32 %s13, 1
    %s21 = ssub.s32 %s13, %s20
    %p22 = scmp.eq.s32.totalorder %s21, 0
    %s24 = sadd.s32 %s23, 1
    %s25 = scalar_select %p22, %s23, %s24
    %p28 = pneg %p22
    %p29 = scmp.eq.s32.totalorder %s13, 1
    %p30 = por %p28, %p29
    %p31 = scmp.ne.s32.totalorder %s23, %s26
    %p32 = scmp.eq.s32.totalorder %s13, 0
    %p33 = por %p31, %p32
    %p34 = scmp.ne.s32.totalorder %s23, %s26
    %p35 = scmp.eq.s32.totalorder %s18, 1
    %p36 = por %p34, %p35
    %p37 = scmp.ne.s32.totalorder %s26, %s27
    %p38 = scmp.eq.s32.totalorder %s18, 0
    %p39 = por %p37, %p38
    %p40 = scmp.ne.s32.totalorder %s26, %s27
    %p41 = scmp.eq.s32.totalorder %s19, 1
    %p42 = por %p40, %p41
    %p44 = scmp.ne.s32.totalorder %s27, %s43
    %p45 = scmp.eq.s32.totalorder %s19, 0
    %p46 = por %p44, %p45
    %s48 = sadd.s32 %s47, 1
    %p51 = scmp.eq.s32.totalorder %s13, 1
    %p52 = scmp.ne.s32.totalorder %s47, %s49
    %p53 = scmp.eq.s32.totalorder %s13, 0
    %p54 = por %p52, %p53
    %p55 = scmp.ne.s32.totalorder %s47, %s49
    %p56 = scmp.eq.s32.totalorder %s18, 1
    %p57 = por %p55, %p56
    %p58 = scmp.ne.s32.totalorder %s49, %s50
    %p59 = scmp.eq.s32.totalorder %s18, 0
    %p60 = por %p58, %p59
    %p61 = scmp.ne.s32.totalorder %s49, %s50
    %p62 = scmp.eq.s32.totalorder %s19, 1
    %p63 = por %p61, %p62
    %p65 = scmp.ne.s32.totalorder %s50, %s64
    %p66 = scmp.eq.s32.totalorder %s19, 0
    %p67 = por %p65, %p66
    %s69 = sadd.s32 %s68, 1
    %p72 = scmp.eq.s32.totalorder %s13, 1
    %p73 = scmp.ne.s32.totalorder %s68, %s70
    %p74 = scmp.eq.s32.totalorder %s13, 0
    %p75 = por %p73, %p74
    %p76 = scmp.ne.s32.totalorder %s68, %s70
    %p77 = scmp.eq.s32.totalorder %s18, 1
    %p78 = por %p76, %p77
    %p79 = scmp.ne.s32.totalorder %s70, %s71
    %p80 = scmp.eq.s32.totalorder %s18, 0
    %p81 = por %p79, %p80
    %p82 = scmp.ne.s32.totalorder %s70, %s71
    %p83 = scmp.eq.s32.totalorder %s19, 1
    %p84 = por %p82, %p83
    %p86 = scmp.ne.s32.totalorder %s71, %s85
    %p87 = scmp.eq.s32.totalorder %s19, 0
    %p88 = por %p86, %p87
    %s90 = sadd.s32 %s89, 1
    %p93 = scmp.eq.s32.totalorder %s13, 1
    %p94 = scmp.ne.s32.totalorder %s89, %s91
    %p95 = scmp.eq.s32.totalorder %s13, 0
    %p96 = por %p94, %p95
    %p97 = scmp.ne.s32.totalorder %s89, %s91
    %p98 = scmp.eq.s32.totalorder %s18, 1
    %p99 = por %p97, %p98
    %p100 = scmp.ne.s32.totalorder %s91, %s92
    %p101 = scmp.eq.s32.totalorder %s18, 0
    %p102 = por %p100, %p101
    %p103 = scmp.ne.s32.totalorder %s91, %s92
    %p104 = scmp.eq.s32.totalorder %s19, 1
    %p105 = por %p103, %p104
    %p107 = scmp.ne.s32.totalorder %s92, %s106
    %p108 = scmp.eq.s32.totalorder %s19, 0
    %p109 = por %p107, %p108
    %s111 = sadd.s32 %s110, 1
    %p114 = scmp.eq.s32.totalorder %s13, 1
    %p115 = scmp.ne.s32.totalorder %s110, %s112
    %p116 = scmp.eq.s32.totalorder %s13, 0
    %p117 = por %p115, %p116
    %p118 = scmp.ne.s32.totalorder %s110, %s112
    %p119 = scmp.eq.s32.totalorder %s18, 1
    %p120 = por %p118, %p119
    %p121 = scmp.ne.s32.totalorder %s112, %s113
    %p122 = scmp.eq.s32.totalorder %s18, 0
    %p123 = por %p121, %p122
    %p124 = scmp.ne.s32.totalorder %s112, %s113
    %p125 = scmp.eq.s32.totalorder %s19, 1
    %p126 = por %p124, %p125
    %p128 = scmp.ne.s32.totalorder %s113, %s127
    %p129 = scmp.eq.s32.totalorder %s19, 0
    %p130 = por %p128, %p129
    %s132 = sadd.s32 %s131, 1
    %p135 = scmp.eq.s32.totalorder %s13, 1
    %p136 = scmp.ne.s32.totalorder %s131, %s133
    %p137 = scmp.eq.s32.totalorder %s13, 0
    %p138 = por %p136, %p137
    %p139 = scmp.ne.s32.totalorder %s131, %s133
    %p140 = scmp.eq.s32.totalorder %s18, 1
    %p141 = por %p139, %p140
    %p142 = scmp.ne.s32.totalorder %s133, %s134
    %p143 = scmp.eq.s32.totalorder %s18, 0
    %p144 = por %p142, %p143
    %p145 = scmp.ne.s32.totalorder %s133, %s134
    %p146 = scmp.eq.s32.totalorder %s19, 1
    %p147 = por %p145, %p146
    %p149 = scmp.ne.s32.totalorder %s134, %s148
    %p150 = scmp.eq.s32.totalorder %s19, 0
    %p151 = por %p149, %p150
    %s153 = sadd.s32 %s152, 1
    %p156 = scmp.eq.s32.totalorder %s13, 1
    %p157 = scmp.ne.s32.totalorder %s152, %s154
    %p158 = scmp.eq.s32.totalorder %s13, 0
    %p159 = por %p157, %p158
    %p160 = scmp.ne.s32.totalorder %s152, %s154
    %p161 = scmp.eq.s32.totalorder %s18, 1
    %p162 = por %p160, %p161
    %p163 = scmp.ne.s32.totalorder %s154, %s155
    %p164 = scmp.eq.s32.totalorder %s18, 0
    %p165 = por %p163, %p164
    %p166 = scmp.ne.s32.totalorder %s154, %s155
    %p167 = scmp.eq.s32.totalorder %s19, 1
    %p168 = por %p166, %p167
    %p170 = scmp.ne.s32.totalorder %s155, %s169
    %p171 = scmp.eq.s32.totalorder %s19, 0
    %p172 = por %p170, %p171
    %s173 = ssub.s32 %s13, %s20
    %p174 = scmp.eq.s32.totalorder %s173, 0
    %s176 = sadd.s32 %s175, 1
    %s177 = scalar_select %p174, %s175, %s176
    %p180 = pneg %p174
    %p181 = scmp.eq.s32.totalorder %s13, 1
    %p182 = por %p180, %p181
    %p183 = scmp.ne.s32.totalorder %s175, %s178
    %p184 = scmp.eq.s32.totalorder %s13, 0
    %p185 = por %p183, %p184
    %p186 = scmp.ne.s32.totalorder %s175, %s178
    %p187 = scmp.eq.s32.totalorder %s18, 1
    %p188 = por %p186, %p187
    %p189 = scmp.ne.s32.totalorder %s178, %s179
    %p190 = scmp.eq.s32.totalorder %s18, 0
    %p191 = por %p189, %p190
    %p192 = scmp.ne.s32.totalorder %s178, %s179
    %p193 = scmp.eq.s32.totalorder %s19, 1
    %p194 = por %p192, %p193
    %p196 = scmp.ne.s32.totalorder %s179, %s195
    %p197 = scmp.eq.s32.totalorder %s19, 0
    %p198 = por %p196, %p197
    %p199 = scmp.le.s32.totalorder 1, %s13
    %p200 = scmp.lt.s32.totalorder %s13, 3
    %p201 = pnand %p199, %p200
    %p202 = pneg %p201
    // Predicated region
    $region9: #{tpu_custom_call.1} parent=5 // pred_check
      _
    $region10: #{tpu_custom_call.1} parent=5 // pred_check_branch
      %204 = sbr.rel (%p201) target = $region12
    $region11: #{tpu_custom_call.1} parent=5 // pred_region
      %s205 = ssub.s32 %s13, 1
      // Predicated region
      $region13: #{tpu_custom_call.1} parent=11 // pred_check
        %p206 = pneg %p60
      $region14: #{tpu_custom_call.1} parent=11 // pred_check_branch
        %208 = sbr.rel (%p206) target = $region16
      $region15: #{tpu_custom_call.1} parent=11 // pred_region
        _
      $region16: #{tpu_custom_call.1} parent=11 // pred_fallthru
        _
      // Predicated region
      $region17: #{tpu_custom_call.1} parent=11 // pred_check
        %p209 = pneg %p81
      $region18: #{tpu_custom_call.1} parent=11 // pred_check_branch
        %211 = sbr.rel (%p209) target = $region20
      $region19: #{tpu_custom_call.1} parent=11 // pred_region
        _
      $region20: #{tpu_custom_call.1} parent=11 // pred_fallthru
        _
      // Predicated region
      $region21: #{tpu_custom_call.1} parent=11 // pred_check
        %p212 = pneg %p102
      $region22: #{tpu_custom_call.1} parent=11 // pred_check_branch
        %214 = sbr.rel (%p212) target = $region24
      $region23: #{tpu_custom_call.1} parent=11 // pred_region
        _
      $region24: #{tpu_custom_call.1} parent=11 // pred_fallthru
        _
      // Predicated region
      $region25: #{tpu_custom_call.1} parent=11 // pred_check
        %p215 = pneg %p123
      $region26: #{tpu_custom_call.1} parent=11 // pred_check_branch
        %217 = sbr.rel (%p215) target = $region28
      $region27: #{tpu_custom_call.1} parent=11 // pred_region
        _
      $region28: #{tpu_custom_call.1} parent=11 // pred_fallthru
        _
      // Predicated region
      $region29: #{tpu_custom_call.1} parent=11 // pred_check
        %p218 = pneg %p144
      $region30: #{tpu_custom_call.1} parent=11 // pred_check_branch
        %220 = sbr.rel (%p218) target = $region32
      $region31: #{tpu_custom_call.1} parent=11 // pred_region
        _
      $region32: #{tpu_custom_call.1} parent=11 // pred_fallthru
        _
      // Predicated region
      $region33: #{tpu_custom_call.1} parent=11 // pred_check
        %p221 = pneg %p165
      $region34: #{tpu_custom_call.1} parent=11 // pred_check_branch
        %223 = sbr.rel (%p221) target = $region36
      $region35: #{tpu_custom_call.1} parent=11 // pred_region
        _
      $region36: #{tpu_custom_call.1} parent=11 // pred_fallthru
        _
    $region12: #{tpu_custom_call.1} parent=5 // pred_fallthru
      _
    %p224 = scmp.lt.s32.totalorder %s13, 2
    // Predicated region
    $region37: #{tpu_custom_call.1} parent=5 // pred_check
      %p225 = pneg %p224
    $region38: #{tpu_custom_call.1} parent=5 // pred_check_branch
      %227 = sbr.rel (%p225) target = $region40
    $region39: #{tpu_custom_call.1} parent=5 // pred_region
      // Predicated region
      $region41: #{tpu_custom_call.1} parent=39 // pred_check
        %p228 = pneg %p33
      $region42: #{tpu_custom_call.1} parent=39 // pred_check_branch
        %230 = sbr.rel (%p228) target = $region44
      $region43: #{tpu_custom_call.1} parent=39 // pred_region
        %s231 = smul.u32 14, %s13
        %p232 = scmp.lt.s32.totalorder %s231, 27
        %s233 = scalar_select %p232, %s231, 27
        %s234 = smul.addr %s233, 8
        %s235 = scalar_lea.vmem %s0, %s234
        %s236 = smul.u32 14, %s13
      $region44: #{tpu_custom_call.1} parent=39 // pred_fallthru
        _
    $region40: #{tpu_custom_call.1} parent=5 // pred_fallthru
      _
    %p237 = scmp.le.s32.totalorder 1, %s13
    %p238 = scmp.lt.s32.totalorder %s13, 3
    %p239 = pnand %p237, %p238
    %p240 = pneg %p239
    // Predicated region
    $region45: #{tpu_custom_call.1} parent=5 // pred_check
      _
    $region46: #{tpu_custom_call.1} parent=5 // pred_check_branch
      %242 = sbr.rel (%p239) target = $region48
    $region47: #{tpu_custom_call.1} parent=5 // pred_region
      %s243 = ssub.s32 %s13, 1
      %s244 = smul.u32 14, %s18
      %p245 = scmp.lt.s32.totalorder %s244, 27
      %s246 = scalar_select %p245, %s244, 27
      %s247 = smul.addr %s246, 8
      %s248 = scalar_lea.vmem %s0, %s247
      %p249 = pneg %p39
      %p250 = pneg %p36
      %p251 = pneg %p60
      %p252 = pneg %p57
      %p253 = pneg %p81
      %p254 = pneg %p78
      %p255 = pneg %p102
      %p256 = pneg %p99
      %p257 = pneg %p123
      %p258 = pneg %p120
      %p259 = pneg %p144
      %p260 = pneg %p141
      %p261 = pneg %p165
      %p262 = pneg %p162
      %p263 = pneg %p191
      %p264 = pneg %p188
      %s265 = smul.u32 14, %s18
      %p266 = scmp.lt.s32.totalorder %s265, 27
      %s267 = scalar_select %p266, %s265, 27
      %s268 = smul.addr %s267, 8
      %s269 = scalar_lea.vmem %s7, %s268
      %s270 = smul.u32 14, %s18
      %p271 = scmp.lt.s32.totalorder %s270, 27
      %s272 = scalar_select %p271, %s270, 27
      %s273 = smul.addr %s272, 8
      %s274 = scalar_lea.vmem %s0, %s273
      %s275 = smul.u32 14, %s18
      %s276 = smul.u32 14, %s18
      %p277 = scmp.lt.s32.totalorder %s276, 27
      %s278 = scalar_select %p277, %s276, 27
      %s279 = smul.addr %s278, 8
      %s280 = scalar_lea.vmem %s7, %s279
      %s281 = smul.u32 14, %s18
      %v283 = vld [vmem:[%s274] sm:$0xff]
      %v284 = vld [vmem:[%s274 + $0x8] sm:$0xff]
      %v285 = vld [vmem:[%s274 + $0x10] sm:$0xff]
      %v286 = vld [vmem:[%s274 + $0x18] sm:$0xff]
      %v287 = vld [vmem:[%s274 + $0x20] sm:$0xff]
      %v288 = vld [vmem:[%s274 + $0x28] sm:$0xff]
      %v289 = vld [vmem:[%s274 + $0x30] sm:$0xff]
      %v290 = vld [vmem:[%s274 + $0x38] sm:$0xff]
      %v291 = vld [vmem:[%s274 + $0x40] sm:$0xff]
      %v292 = vld [vmem:[%s274 + $0x48] sm:$0xff]
      %v293 = vld [vmem:[%s274 + $0x50] sm:$0xff]
      %v294 = vld [vmem:[%s274 + $0x58] sm:$0xff]
      %v295 = vld [vmem:[%s274 + $0x60] sm:$0xff]
      %v296 = vld [vmem:[%s274 + $0x68] sm:$0xff]
      %v297 = vpack.c.bf16 %v284, %v283
      %v298 = vpack.c.bf16 %v286, %v285
      %v299 = vpack.c.bf16 %v288, %v287
      %v300 = vpack.c.bf16 %v290, %v289
      %v301 = vpack.c.bf16 %v292, %v291
      %v302 = vpack.c.bf16 %v294, %v293
      %v303 = vpack.c.bf16 %v296, %v295
      %v304 = vld [vmem:[%s1] sm:$0xf]
      %v305 = vld [vmem:[%s1 + $0x4] sm:$0xf]
      %v306 = vld [vmem:[%s2] sm:$0x1]
      %v308 = vlaneseq
      %v309 = vshrl.u32 %v308, 7
      %v310 = vsub.s32 0, %v309
      %v311 = vrot.slane %v306, %v310
      %v315 = vunpack.c.l.b16 %v304
      %v316 = vunpack.c.l.b16 %v305
      %v317 = vpack.c.b16 %v316, %v315
      %vm319 = vcmask 130048
      %v321 = vsel %vm319, %v297, 0
      %v324 = vsel %vm319, %v298, 0
      %v327 = vsel %vm319, %v299, 0
      %v330 = vsel %vm319, %v300, 0
      %v333 = vsel %vm319, %v301, 0
      %v336 = vsel %vm319, %v302, 0
      %v339 = vsel %vm319, %v303, 0
      %341 = vmatprep.subr.bf16.mxu0 0
      %342 = vmatpush1.bf16.msra.mxu0 0
      %343 = vmatprep.subr.bf16.mxu0 0
      %344 = vmatpush1.bf16.msra.mxu0 0
      %345 = vmatprep.subr.bf16.mxu0 0
      %346 = vmatpush1.bf16.msra.mxu0 0
      %347 = vmatprep.subr.bf16.mxu0 0
      %348 = vmatpush1.bf16.msra.mxu0 0
      %349 = vmatprep.subr.bf16.mxu0 0
      %350 = vmatpush1.bf16.msra.mxu0 0
      %351 = vmatprep.subr.bf16.mxu0 0
      %352 = vmatpush1.bf16.msra.mxu0 0
      %353 = vmatprep.subr.bf16.mxu0 0
      %354 = vmatpush1.bf16.msra.mxu0 0
      %355 = vmatprep.subr.bf16.mxu0 0
      %356 = vmatpush1.bf16.msra.mxu0 %v317
      %357 = vmatprep.subr.bf16.mxu0 0
      %358 = vmatpush2.bf16.msra.mxu0 0
      %359 = vmatprep.subr.bf16.mxu0 0
      %360 = vmatpush2.bf16.msra.mxu0 0
      %361 = vmatprep.subr.bf16.mxu0 0
      %362 = vmatpush2.bf16.msra.mxu0 0
      %363 = vmatprep.subr.bf16.mxu0 0
      %364 = vmatpush2.bf16.msra.mxu0 0
      %365 = vmatprep.subr.bf16.mxu0 0
      %366 = vmatpush2.bf16.msra.mxu0 0
      %367 = vmatprep.subr.bf16.mxu0 0
      %368 = vmatpush2.bf16.msra.mxu0 0
      %369 = vmatprep.subr.bf16.mxu0 0
      %370 = vmatpush2.bf16.msra.mxu0 0
      %371 = vmatprep.subr.bf16.mxu0 0
      %372 = vmatpush2.bf16.msra.mxu0 0
      %373 = vmatprep.mubr.bf16.mxu0 0
      %374 = vmatmul.mubr.bf16.gmra.mxu0 %v321
      %v375 = vpop.f32.mrf.mxu0
      %v376 = vadd.f32 %v311, %v375
      %v377 = vpop.f32.mrf.mxu0
      %v378 = vpop.f32.mrf.mxu0
      %v379 = vadd.f32 %v311, %v378
      %v380 = vpop.f32.mrf.mxu0
      %381 = vmatprep.mubr.bf16.mxu0 0
      %382 = vmatmul.mubr.bf16.gmra.mxu0 %v324
      %v383 = vpop.f32.mrf.mxu0
      %v384 = vadd.f32 %v311, %v383
      %v385 = vpop.f32.mrf.mxu0
      %v386 = vpop.f32.mrf.mxu0
      %v387 = vadd.f32 %v311, %v386
      %v388 = vpop.f32.mrf.mxu0
      %389 = vmatprep.mubr.bf16.mxu0 0
      %390 = vmatmul.mubr.bf16.gmra.mxu0 %v327
      %v391 = vpop.f32.mrf.mxu0
      %v392 = vadd.f32 %v311, %v391
      %v393 = vpop.f32.mrf.mxu0
      %v394 = vpop.f32.mrf.mxu0
      %v395 = vadd.f32 %v311, %v394
      %v396 = vpop.f32.mrf.mxu0
      %397 = vmatprep.mubr.bf16.mxu0 0
      %398 = vmatmul.mubr.bf16.gmra.mxu0 %v330
      %v399 = vpop.f32.mrf.mxu0
      %v400 = vadd.f32 %v311, %v399
      %v401 = vpop.f32.mrf.mxu0
      %v402 = vpop.f32.mrf.mxu0
      %v403 = vadd.f32 %v311, %v402
      %v404 = vpop.f32.mrf.mxu0
      %405 = vmatprep.mubr.bf16.mxu0 0
      %406 = vmatmul.mubr.bf16.gmra.mxu0 %v333
      %v407 = vpop.f32.mrf.mxu0
      %v408 = vadd.f32 %v311, %v407
      %v409 = vpop.f32.mrf.mxu0
      %v410 = vpop.f32.mrf.mxu0
      %v411 = vadd.f32 %v311, %v410
      %v412 = vpop.f32.mrf.mxu0
      %413 = vmatprep.mubr.bf16.mxu0 0
      %414 = vmatmul.mubr.bf16.gmra.mxu0 %v336
      %v415 = vpop.f32.mrf.mxu0
      %v416 = vadd.f32 %v311, %v415
      %v417 = vpop.f32.mrf.mxu0
      %v418 = vpop.f32.mrf.mxu0
      %v419 = vadd.f32 %v311, %v418
      %v420 = vpop.f32.mrf.mxu0
      %421 = vmatprep.mubr.bf16.mxu0 0
      %422 = vmatmul.mubr.bf16.gmra.mxu0 %v339
      %v423 = vpop.f32.mrf.mxu0
      %v424 = vadd.f32 %v311, %v423
      %v425 = vpop.f32.mrf.mxu0
      %v426 = vpop.f32.mrf.mxu0
      %v427 = vadd.f32 %v311, %v426
      %v428 = vpop.f32.mrf.mxu0
      %429 = vdwg.mxu0
      %v430 = vmax.f32 %v376, 0.0
      %v431 = vmax.f32 %v379, 0.0
      %v432 = vmax.f32 %v384, 0.0
      %v433 = vmax.f32 %v387, 0.0
      %v434 = vmax.f32 %v392, 0.0
      %v435 = vmax.f32 %v395, 0.0
      %v436 = vmax.f32 %v400, 0.0
      %v437 = vmax.f32 %v403, 0.0
      %v438 = vmax.f32 %v408, 0.0
      %v439 = vmax.f32 %v411, 0.0
      %v440 = vmax.f32 %v416, 0.0
      %v441 = vmax.f32 %v419, 0.0
      %v442 = vmax.f32 %v424, 0.0
      %v443 = vmax.f32 %v427, 0.0
      %v444 = vpack.c.bf16 %v431, %v430
      %v445 = vpack.c.bf16 %v433, %v432
      %v446 = vpack.c.bf16 %v435, %v434
      %v447 = vpack.c.bf16 %v437, %v436
      %v448 = vpack.c.bf16 %v439, %v438
      %v449 = vpack.c.bf16 %v441, %v440
      %v450 = vpack.c.bf16 %v443, %v442
      %v451 = vld [vmem:[%s3] sm:$0xf]
      %v452 = vld [vmem:[%s3 + $0x4] sm:$0xf]
      %v453 = vld [vmem:[%s3 + $0x8] sm:$0xf]
      %v454 = vld [vmem:[%s3 + $0xc] sm:$0xf]
      %v455 = vld [vmem:[%s4] sm:$0x1]
      %v457 = vlaneseq
      %v458 = vshrl.u32 %v457, 7
      %v459 = vsub.s32 0, %v458
      %v460 = vrot.slane %v455, %v459
      %v466 = vunpack.c.l.b16 %v451
      %v467 = vunpack.c.l.b16 %v452
      %v468 = vunpack.c.l.b16 %v453
      %v469 = vunpack.c.l.b16 %v454
      %v470 = vpack.c.b16 %v467, %v466
      %v471 = vpack.c.b16 %v469, %v468
      %vm474 = vcmask 261120
      %v476 = vsel %vm474, %v444, 0
      %v479 = vsel %vm474, %v445, 0
      %v482 = vsel %vm474, %v446, 0
      %v485 = vsel %vm474, %v447, 0
      %v488 = vsel %vm474, %v448, 0
      %v491 = vsel %vm474, %v449, 0
      %v494 = vsel %vm474, %v450, 0
      %496 = vmatprep.subr.bf16.mxu0 0
      %497 = vmatpush1.bf16.msra.mxu0 0
      %498 = vmatprep.subr.bf16.mxu0 0
      %499 = vmatpush1.bf16.msra.mxu0 0
      %500 = vmatprep.subr.bf16.mxu0 0
      %501 = vmatpush1.bf16.msra.mxu0 0
      %502 = vmatprep.subr.bf16.mxu0 0
      %503 = vmatpush1.bf16.msra.mxu0 0
      %504 = vmatprep.subr.bf16.mxu0 0
      %505 = vmatpush1.bf16.msra.mxu0 0
      %506 = vmatprep.subr.bf16.mxu0 0
      %507 = vmatpush1.bf16.msra.mxu0 0
      %508 = vmatprep.subr.bf16.mxu0 0
      %509 = vmatpush1.bf16.msra.mxu0 %v471
      %510 = vmatprep.subr.bf16.mxu0 0
      %511 = vmatpush1.bf16.msra.mxu0 %v470
      %512 = vmatprep.subr.bf16.mxu0 0
      %513 = vmatpush2.bf16.msra.mxu0 0
      %514 = vmatprep.subr.bf16.mxu0 0
      %515 = vmatpush2.bf16.msra.mxu0 0
      %516 = vmatprep.subr.bf16.mxu0 0
      %517 = vmatpush2.bf16.msra.mxu0 0
      %518 = vmatprep.subr.bf16.mxu0 0
      %519 = vmatpush2.bf16.msra.mxu0 0
      %520 = vmatprep.subr.bf16.mxu0 0
      %521 = vmatpush2.bf16.msra.mxu0 0
      %522 = vmatprep.subr.bf16.mxu0 0
      %523 = vmatpush2.bf16.msra.mxu0 0
      %524 = vmatprep.subr.bf16.mxu0 0
      %525 = vmatpush2.bf16.msra.mxu0 0
      %526 = vmatprep.subr.bf16.mxu0 0
      %527 = vmatpush2.bf16.msra.mxu0 0
      %528 = vmatprep.mubr.bf16.mxu0 0
      %529 = vmatmul.mubr.bf16.gmra.mxu0 %v476
      %v530 = vpop.f32.mrf.mxu0
      %v531 = vadd.f32 %v460, %v530
      %v532 = vpop.f32.mrf.mxu0
      %v533 = vpop.f32.mrf.mxu0
      %v534 = vadd.f32 %v460, %v533
      %v535 = vpop.f32.mrf.mxu0
      %536 = vmatprep.mubr.bf16.mxu0 0
      %537 = vmatmul.mubr.bf16.gmra.mxu0 %v479
      %v538 = vpop.f32.mrf.mxu0
      %v539 = vadd.f32 %v460, %v538
      %v540 = vpop.f32.mrf.mxu0
      %v541 = vpop.f32.mrf.mxu0
      %v542 = vadd.f32 %v460, %v541
      %v543 = vpop.f32.mrf.mxu0
      %544 = vmatprep.mubr.bf16.mxu0 0
      %545 = vmatmul.mubr.bf16.gmra.mxu0 %v482
      %v546 = vpop.f32.mrf.mxu0
      %v547 = vadd.f32 %v460, %v546
      %v548 = vpop.f32.mrf.mxu0
      %v549 = vpop.f32.mrf.mxu0
      %v550 = vadd.f32 %v460, %v549
      %v551 = vpop.f32.mrf.mxu0
      %552 = vmatprep.mubr.bf16.mxu0 0
      %553 = vmatmul.mubr.bf16.gmra.mxu0 %v485
      %v554 = vpop.f32.mrf.mxu0
      %v555 = vadd.f32 %v460, %v554
      %v556 = vpop.f32.mrf.mxu0
      %v557 = vpop.f32.mrf.mxu0
      %v558 = vadd.f32 %v460, %v557
      %v559 = vpop.f32.mrf.mxu0
      %560 = vmatprep.mubr.bf16.mxu0 0
      %561 = vmatmul.mubr.bf16.gmra.mxu0 %v488
      %v562 = vpop.f32.mrf.mxu0
      %v563 = vadd.f32 %v460, %v562
      %v564 = vpop.f32.mrf.mxu0
      %v565 = vpop.f32.mrf.mxu0
      %v566 = vadd.f32 %v460, %v565
      %v567 = vpop.f32.mrf.mxu0
      %568 = vmatprep.mubr.bf16.mxu0 0
      %569 = vmatmul.mubr.bf16.gmra.mxu0 %v491
      %v570 = vpop.f32.mrf.mxu0
      %v571 = vadd.f32 %v460, %v570
      %v572 = vpop.f32.mrf.mxu0
      %v573 = vpop.f32.mrf.mxu0
      %v574 = vadd.f32 %v460, %v573
      %v575 = vpop.f32.mrf.mxu0
      %576 = vmatprep.mubr.bf16.mxu0 0
      %577 = vmatmul.mubr.bf16.gmra.mxu0 %v494
      %v578 = vpop.f32.mrf.mxu0
      %v579 = vadd.f32 %v460, %v578
      %v580 = vpop.f32.mrf.mxu0
      %v581 = vpop.f32.mrf.mxu0
      %v582 = vadd.f32 %v460, %v581
      %v583 = vpop.f32.mrf.mxu0
      %584 = vdwg.mxu0
      %v585 = vmax.f32 %v531, 0.0
      %v586 = vmax.f32 %v534, 0.0
      %v587 = vmax.f32 %v539, 0.0
      %v588 = vmax.f32 %v542, 0.0
      %v589 = vmax.f32 %v547, 0.0
      %v590 = vmax.f32 %v550, 0.0
      %v591 = vmax.f32 %v555, 0.0
      %v592 = vmax.f32 %v558, 0.0
      %v593 = vmax.f32 %v563, 0.0
      %v594 = vmax.f32 %v566, 0.0
      %v595 = vmax.f32 %v571, 0.0
      %v596 = vmax.f32 %v574, 0.0
      %v597 = vmax.f32 %v579, 0.0
      %v598 = vmax.f32 %v582, 0.0
      %v599 = vpack.c.bf16 %v586, %v585
      %v600 = vpack.c.bf16 %v588, %v587
      %v601 = vpack.c.bf16 %v590, %v589
      %v602 = vpack.c.bf16 %v592, %v591
      %v603 = vpack.c.bf16 %v594, %v593
      %v604 = vpack.c.bf16 %v596, %v595
      %v605 = vpack.c.bf16 %v598, %v597
      %v606 = vld [vmem:[%s5] sm:$0xf]
      %v607 = vld [vmem:[%s5 + $0x4] sm:$0xf]
      %v608 = vld [vmem:[%s5 + $0x8] sm:$0xf]
      %v609 = vld [vmem:[%s5 + $0xc] sm:$0xf]
      %v610 = vld [vmem:[%s6] sm:$0x1]
      %v612 = vlaneseq
      %v613 = vshrl.u32 %v612, 7
      %v614 = vsub.s32 0, %v613
      %v615 = vrot.slane %v610, %v614
      %v621 = vunpack.c.l.b16 %v606
      %v622 = vunpack.c.l.b16 %v607
      %v623 = vunpack.c.l.b16 %v608
      %v624 = vunpack.c.l.b16 %v609
      %v625 = vpack.c.b16 %v622, %v621
      %v626 = vpack.c.b16 %v624, %v623
      %v630 = vsel %vm474, %v599, 0
      %v633 = vsel %vm474, %v600, 0
      %v636 = vsel %vm474, %v601, 0
      %v639 = vsel %vm474, %v602, 0
      %v642 = vsel %vm474, %v603, 0
      %v645 = vsel %vm474, %v604, 0
      %v648 = vsel %vm474, %v605, 0
      %650 = vmatprep.subr.bf16.mxu0 0
      %651 = vmatpush1.bf16.msra.mxu0 0
      %652 = vmatprep.subr.bf16.mxu0 0
      %653 = vmatpush1.bf16.msra.mxu0 0
      %654 = vmatprep.subr.bf16.mxu0 0
      %655 = vmatpush1.bf16.msra.mxu0 0
      %656 = vmatprep.subr.bf16.mxu0 0
      %657 = vmatpush1.bf16.msra.mxu0 0
      %658 = vmatprep.subr.bf16.mxu0 0
      %659 = vmatpush1.bf16.msra.mxu0 0
      %660 = vmatprep.subr.bf16.mxu0 0
      %661 = vmatpush1.bf16.msra.mxu0 0
      %662 = vmatprep.subr.bf16.mxu0 0
      %663 = vmatpush1.bf16.msra.mxu0 %v626
      %664 = vmatprep.subr.bf16.mxu0 0
      %665 = vmatpush1.bf16.msra.mxu0 %v625
      %666 = vmatprep.subr.bf16.mxu0 0
      %667 = vmatpush2.bf16.msra.mxu0 0
      %668 = vmatprep.subr.bf16.mxu0 0
      %669 = vmatpush2.bf16.msra.mxu0 0
      %670 = vmatprep.subr.bf16.mxu0 0
      %671 = vmatpush2.bf16.msra.mxu0 0
      %672 = vmatprep.subr.bf16.mxu0 0
      %673 = vmatpush2.bf16.msra.mxu0 0
      %674 = vmatprep.subr.bf16.mxu0 0
      %675 = vmatpush2.bf16.msra.mxu0 0
      %676 = vmatprep.subr.bf16.mxu0 0
      %677 = vmatpush2.bf16.msra.mxu0 0
      %678 = vmatprep.subr.bf16.mxu0 0
      %679 = vmatpush2.bf16.msra.mxu0 0
      %680 = vmatprep.subr.bf16.mxu0 0
      %681 = vmatpush2.bf16.msra.mxu0 0
      %682 = vmatprep.mubr.bf16.mxu0 0
      %683 = vmatmul.mubr.bf16.gmra.mxu0 %v630
      %v684 = vpop.f32.mrf.mxu0
      %v685 = vadd.f32 %v615, %v684
      %v686 = vpop.f32.mrf.mxu0
      %v687 = vpop.f32.mrf.mxu0
      %v688 = vadd.f32 %v615, %v687
      %v689 = vpop.f32.mrf.mxu0
      %690 = vmatprep.mubr.bf16.mxu0 0
      %691 = vmatmul.mubr.bf16.gmra.mxu0 %v633
      %v692 = vpop.f32.mrf.mxu0
      %v693 = vadd.f32 %v615, %v692
      %v694 = vpop.f32.mrf.mxu0
      %v695 = vpop.f32.mrf.mxu0
      %v696 = vadd.f32 %v615, %v695
      %v697 = vpop.f32.mrf.mxu0
      %698 = vmatprep.mubr.bf16.mxu0 0
      %699 = vmatmul.mubr.bf16.gmra.mxu0 %v636
      %v700 = vpop.f32.mrf.mxu0
      %v701 = vadd.f32 %v615, %v700
      %v702 = vpop.f32.mrf.mxu0
      %v703 = vpop.f32.mrf.mxu0
      %v704 = vadd.f32 %v615, %v703
      %v705 = vpop.f32.mrf.mxu0
      %706 = vmatprep.mubr.bf16.mxu0 0
      %707 = vmatmul.mubr.bf16.gmra.mxu0 %v639
      %v708 = vpop.f32.mrf.mxu0
      %v709 = vadd.f32 %v615, %v708
      %v710 = vpop.f32.mrf.mxu0
      %v711 = vpop.f32.mrf.mxu0
      %v712 = vadd.f32 %v615, %v711
      %v713 = vpop.f32.mrf.mxu0
      %714 = vmatprep.mubr.bf16.mxu0 0
      %715 = vmatmul.mubr.bf16.gmra.mxu0 %v642
      %v716 = vpop.f32.mrf.mxu0
      %v717 = vadd.f32 %v615, %v716
      %v718 = vpop.f32.mrf.mxu0
      %v719 = vpop.f32.mrf.mxu0
      %v720 = vadd.f32 %v615, %v719
      %v721 = vpop.f32.mrf.mxu0
      %722 = vmatprep.mubr.bf16.mxu0 0
      %723 = vmatmul.mubr.bf16.gmra.mxu0 %v645
      %v724 = vpop.f32.mrf.mxu0
      %v725 = vadd.f32 %v615, %v724
      %v726 = vpop.f32.mrf.mxu0
      %v727 = vpop.f32.mrf.mxu0
      %v728 = vadd.f32 %v615, %v727
      %v729 = vpop.f32.mrf.mxu0
      %730 = vmatprep.mubr.bf16.mxu0 0
      %731 = vmatmul.mubr.bf16.gmra.mxu0 %v648
      %v732 = vpop.f32.mrf.mxu0
      %v733 = vadd.f32 %v615, %v732
      %v734 = vpop.f32.mrf.mxu0
      %v735 = vpop.f32.mrf.mxu0
      %v736 = vadd.f32 %v615, %v735
      %v737 = vpop.f32.mrf.mxu0
      %738 = vdwg.mxu0
      %v739 = vxor.u32 %v685, 2147483648
      %v740 = vxor.u32 %v688, 2147483648
      %v741 = vxor.u32 %v693, 2147483648
      %v742 = vxor.u32 %v696, 2147483648
      %v743 = vxor.u32 %v701, 2147483648
      %v744 = vxor.u32 %v704, 2147483648
      %v745 = vxor.u32 %v709, 2147483648
      %v746 = vxor.u32 %v712, 2147483648
      %v747 = vxor.u32 %v717, 2147483648
      %v748 = vxor.u32 %v720, 2147483648
      %v749 = vxor.u32 %v725, 2147483648
      %v750 = vxor.u32 %v728, 2147483648
      %v751 = vxor.u32 %v733, 2147483648
      %v752 = vxor.u32 %v736, 2147483648
      %v753 = vmul.f32 %v739, 1.442695
      %v754 = vpow.pop %v753
      %v755 = vmul.f32 %v740, 1.442695
      %v756 = vpow.pop %v755
      %v757 = vmul.f32 %v741, 1.442695
      %v758 = vpow.pop %v757
      %v759 = vmul.f32 %v742, 1.442695
      %v760 = vpow.pop %v759
      %v761 = vmul.f32 %v743, 1.442695
      %v762 = vpow.pop %v761
      %v763 = vmul.f32 %v744, 1.442695
      %v764 = vpow.pop %v763
      %v765 = vmul.f32 %v745, 1.442695
      %v766 = vpow.pop %v765
      %v767 = vmul.f32 %v746, 1.442695
      %v768 = vpow.pop %v767
      %v769 = vmul.f32 %v747, 1.442695
      %v770 = vpow.pop %v769
      %v771 = vmul.f32 %v748, 1.442695
      %v772 = vpow.pop %v771
      %v773 = vmul.f32 %v749, 1.442695
      %v774 = vpow.pop %v773
      %v775 = vmul.f32 %v750, 1.442695
      %v776 = vpow.pop %v775
      %v777 = vmul.f32 %v751, 1.442695
      %v778 = vpow.pop %v777
      %v779 = vmul.f32 %v752, 1.442695
      %v780 = vpow.pop %v779
      %v781 = vadd.f32 %v754, 1.0
      %v782 = vadd.f32 %v756, 1.0
      %v783 = vadd.f32 %v758, 1.0
      %v784 = vadd.f32 %v760, 1.0
      %v785 = vadd.f32 %v762, 1.0
      %v786 = vadd.f32 %v764, 1.0
      %v787 = vadd.f32 %v766, 1.0
      %v788 = vadd.f32 %v768, 1.0
      %v789 = vadd.f32 %v770, 1.0
      %v790 = vadd.f32 %v772, 1.0
      %v791 = vadd.f32 %v774, 1.0
      %v792 = vadd.f32 %v776, 1.0
      %v793 = vadd.f32 %v778, 1.0
      %v794 = vadd.f32 %v780, 1.0
      %v795 = vrcp.pop %v781
      %v796 = vmul.f32 1.0, %v795
      %v797 = vrcp.pop %v782
      %v798 = vmul.f32 1.0, %v797
      %v799 = vrcp.pop %v783
      %v800 = vmul.f32 1.0, %v799
      %v801 = vrcp.pop %v784
      %v802 = vmul.f32 1.0, %v801
      %v803 = vrcp.pop %v785
      %v804 = vmul.f32 1.0, %v803
      %v805 = vrcp.pop %v786
      %v806 = vmul.f32 1.0, %v805
      %v807 = vrcp.pop %v787
      %v808 = vmul.f32 1.0, %v807
      %v809 = vrcp.pop %v788
      %v810 = vmul.f32 1.0, %v809
      %v811 = vrcp.pop %v789
      %v812 = vmul.f32 1.0, %v811
      %v813 = vrcp.pop %v790
      %v814 = vmul.f32 1.0, %v813
      %v815 = vrcp.pop %v791
      %v816 = vmul.f32 1.0, %v815
      %v817 = vrcp.pop %v792
      %v818 = vmul.f32 1.0, %v817
      %v819 = vrcp.pop %v793
      %v820 = vmul.f32 1.0, %v819
      %v821 = vrcp.pop %v794
      %v822 = vmul.f32 1.0, %v821
      %vm823 = vcmask 23552
      %824 = vst.msk [vmem:[%s280] sm:$0xff] %vm823, %v796
      %825 = vst.msk [vmem:[%s280 + $0x8] sm:$0xff] %vm823, %v798
      %826 = vst.msk [vmem:[%s280 + $0x10] sm:$0xff] %vm823, %v800
      %827 = vst.msk [vmem:[%s280 + $0x18] sm:$0xff] %vm823, %v802
      %828 = vst.msk [vmem:[%s280 + $0x20] sm:$0xff] %vm823, %v804
      %829 = vst.msk [vmem:[%s280 + $0x28] sm:$0xff] %vm823, %v806
      %830 = vst.msk [vmem:[%s280 + $0x30] sm:$0xff] %vm823, %v808
      %831 = vst.msk [vmem:[%s280 + $0x38] sm:$0xff] %vm823, %v810
      %832 = vst.msk [vmem:[%s280 + $0x40] sm:$0xff] %vm823, %v812
      %833 = vst.msk [vmem:[%s280 + $0x48] sm:$0xff] %vm823, %v814
      %834 = vst.msk [vmem:[%s280 + $0x50] sm:$0xff] %vm823, %v816
      %835 = vst.msk [vmem:[%s280 + $0x58] sm:$0xff] %vm823, %v818
      %836 = vst.msk [vmem:[%s280 + $0x60] sm:$0xff] %vm823, %v820
      %837 = vst.msk [vmem:[%s280 + $0x68] sm:$0xff] %vm823, %v822
      %s838 = smul.u32 14, %s18
      %p839 = scmp.lt.s32.totalorder %s838, 27
      %s840 = scalar_select %p839, %s838, 27
      %s841 = smul.addr %s840, 8
      %s842 = scalar_lea.vmem %s7, %s841
      // Predicated region
      $region49: #{tpu_custom_call.1} parent=47 // pred_check
        %p843 = pneg %p188
      $region50: #{tpu_custom_call.1} parent=47 // pred_check_branch
        %845 = sbr.rel (%p843) target = $region52
      $region51: #{tpu_custom_call.1} parent=47 // pred_region
        %s846 = smul.u32 14, %s18
      $region52: #{tpu_custom_call.1} parent=47 // pred_fallthru
        _
    $region48: #{tpu_custom_call.1} parent=5 // pred_fallthru
      _
    %p847 = scmp.le.s32.totalorder 2, %s13
    // Predicated region
    $region53: #{tpu_custom_call.1} parent=5 // pred_check
      %p848 = pneg %p847
    $region54: #{tpu_custom_call.1} parent=5 // pred_check_branch
      %850 = sbr.rel (%p848) target = $region56
    $region55: #{tpu_custom_call.1} parent=5 // pred_region
      %s851 = ssub.s32 %s13, 2
      // Predicated region
      $region57: #{tpu_custom_call.1} parent=55 // pred_check
        %p852 = pneg %p194
      $region58: #{tpu_custom_call.1} parent=55 // pred_check_branch
        %854 = sbr.rel (%p852) target = $region60
      $region59: #{tpu_custom_call.1} parent=55 // pred_region
        %s855 = smul.u32 14, %s19
        %p856 = scmp.lt.s32.totalorder %s855, 27
        %s857 = scalar_select %p856, %s855, 27
        %s858 = smul.addr %s857, 8
        %s859 = scalar_lea.vmem %s7, %s858
      $region60: #{tpu_custom_call.1} parent=55 // pred_fallthru
        _
    $region56: #{tpu_custom_call.1} parent=5 // pred_fallthru
      _
  $region6: #{tpu_custom_call.1} parent=0 // loop_footer
    %s17 = sadd.s32 1, %s13
  $region7: #{tpu_custom_call.1} parent=0 // loop_footer_branch
    %12 = sbr.rel target = $region3
  $region8: #{tpu_custom_call.1} parent=0 // loop_exit
    _

</llo_original>
